<compile_context>
chip_gen: v7x
topology: tpu7x:2x2x1
jax: 0.10.0
libtpu: 0.0.40
codegen_flags: <defaults>
</compile_context>

<pallas_src>
import jax
import jax.numpy as jnp
from jax.experimental import pallas as pl
from jax.experimental.pallas import tpu as pltpu


def _select_copy_kernel(pos_ref, x_hbm, o_hbm, sem):
    # pos_ref : SMEM scalar-prefetch ref holding the leading-axis index.
    # x_hbm   : full input, left in place in HBM (memory_space=pl.ANY).
    # o_hbm   : output slice, left in place in HBM (memory_space=pl.ANY).
    # Single direct HBM -> HBM DMA of the selected slice.
    cp = pltpu.make_async_copy(x_hbm.at[pos_ref[0]], o_hbm, sem)
    cp.start()
    cp.wait()


def select(x, position):
    """Pallas equivalent of `x[position]` along the leading axis."""
    B = x.shape[0]
    slice_shape = x.shape[1:]
    n = 1
    for d in slice_shape:
        n *= d

    # Lane-dense presentation: make the last dim a multiple of 128 when possible
    # (pure layout plumbing in the wrapper; no extra compute).
    if n % 128 == 0 and n >= 128:
        flat_shape = (n // 128, 128)
    else:
        flat_shape = (n,)
    x_flat = x.reshape((B,) + flat_shape)

    # Runtime scalar position (works for Python ints and traced/JAX scalars).
    pos_arr = jnp.asarray(position, dtype=jnp.int32).reshape((1,))

    out_flat = pl.pallas_call(
        _select_copy_kernel,
        out_shape=jax.ShapeDtypeStruct(flat_shape, x.dtype),
        grid_spec=pltpu.PrefetchScalarGridSpec(
            num_scalar_prefetch=1,
            grid=(1,),
            in_specs=[pl.BlockSpec(memory_space=pl.ANY)],
            out_specs=pl.BlockSpec(memory_space=pl.ANY),
            scratch_shapes=[pltpu.SemaphoreType.DMA],
        ),
        compiler_params=pltpu.CompilerParams(
            dimension_semantics=("arbitrary",),
            has_side_effects=True,
        ),
    )(pos_arr, x_flat)

    return out_flat.reshape(slice_shape)


if __name__ == "__main__":
    key = jax.random.PRNGKey(0)
    # Small shapes consistent with the forward: x indexed along the leading axis.
    B, C, H, W = 2, 4, 16, 16
    x = jax.random.normal(key, (B, C, H, W), dtype=jnp.float32)

    position = 1  # module's __init__ argument

    out = select(x, position)
    out = jax.block_until_ready(out)

    # Reference semantics check: x[position]
    ref = x[position]
    assert out.shape == ref.shape, (out.shape, ref.shape)
    assert out.dtype == ref.dtype
    assert jnp.allclose(out, ref), "Mismatch vs reference x[position]"

    # Exercise the runtime-scalar path (position as a JAX scalar, no closure).
    out0 = jax.block_until_ready(select(x, jnp.int32(0)))
    assert jnp.allclose(out0, x[0]), "Mismatch vs reference x[0]"

    print("KERNEL_OK")
</pallas_src>

<mosaic_0001>
module attributes {stable_mosaic.version = 11 : i64} {
  func.func @_select_copy_kernel(%arg0: i32, %arg1: memref<1xi32, #tpu.memory_space<smem>>, %arg2: memref<2x8x128xf32, #tpu.memory_space<any>>, %arg3: memref<8x128xf32, #tpu.memory_space<any>>, %arg4: memref<!tpu.dma_semaphore, #tpu.memory_space<semaphore_mem>>) attributes {dimension_semantics = [#tpu.dimension_semantics<arbitrary>], iteration_bounds = array<i64: 1>, scalar_prefetch = 1 : i64, scratch_operands = 1 : i64, tpu.core_type = #tpu.core_type<tc>, window_params = [{}, {}]} {
    %c0 = arith.constant 0 : index
    %0 = memref.load %arg1[%c0] : memref<1xi32, #tpu.memory_space<smem>>
    %c0_i32 = arith.constant 0 : i32
    %c0_i32_0 = arith.constant 0 : i32
    %1 = tpu.memref_slice %arg2[%0, %c0_i32, %c0_i32_0] : memref<2x8x128xf32, #tpu.memory_space<any>> -> memref<1x8x128xf32, #tpu.memory_space<any>>
    %2 = tpu.memref_squeeze %1 : memref<1x8x128xf32, #tpu.memory_space<any>> -> memref<8x128xf32, #tpu.memory_space<any>>
    tpu.enqueue_dma source(%2 : memref<8x128xf32, #tpu.memory_space<any>>) target(%arg3 : memref<8x128xf32, #tpu.memory_space<any>>) target_semaphore(%arg4 : memref<!tpu.dma_semaphore, #tpu.memory_space<semaphore_mem>>)
    %c0_i32_1 = arith.constant 0 : i32
    %c0_i32_2 = arith.constant 0 : i32
    %3 = tpu.memref_slice %arg2[%0, %c0_i32_1, %c0_i32_2] : memref<2x8x128xf32, #tpu.memory_space<any>> -> memref<1x8x128xf32, #tpu.memory_space<any>>
    %4 = tpu.memref_squeeze %3 : memref<1x8x128xf32, #tpu.memory_space<any>> -> memref<8x128xf32, #tpu.memory_space<any>>
    tpu.wait_dma2 semaphore(%arg4 : memref<!tpu.dma_semaphore, #tpu.memory_space<semaphore_mem>>) src(%4 : memref<8x128xf32, #tpu.memory_space<any>>) dst(%arg3 : memref<8x128xf32, #tpu.memory_space<any>>)
    return
  }
}

</mosaic_0001>

<llo_original>
// kernel: tpu_custom_call.1
$region0: #{tpu_custom_call.1}
  #allocation0 [shape = 'u32[]', space=smem, size = 0x4, offset = 0x4, fixed_abs, tag = 'smem constant byte address 0x4 - core index']
  #allocation1 [shape = 'u32[144,128]{1,0:T(1,128)}', space=vmem, size = 0x12000, scoped, tag = 'internal scratch']
  #allocation2 [shape = 's32[1]{0}', space=sflag, size = 0x4, scoped, tag = 'scratch operand']
  #allocation3 [shape = 's32[1]{0}', space=sflag, size = 0x4, scoped, tag = 'scoped memory for tpu_custom_call.1']
  #allocation4 [shape = 's32[1]{0:T(128)S(6)}', space=smem, size = 0x200, scoped, tag = 'prefetched SMEM operand 0']
  #allocation5 [shape = 's32[]', space=sflag, size = 0x4, offset = 0, fixed_abs, tag = 'sflag constant byte address 0x0 - dummy sync flag']
  #allocation6 [shape = 'u32[0]{0}', space=smem, size = 0, offset = 0, fixed_abs, tag = 'smem constant byte address 0x0 - null']
  %s0 = inlined_call_operand.<no memory space> [shape: s32[1], index: 0, kind: input, shape index: {}]
  %s1 = inlined_call_operand.hbm [shape: f32[2,8,128], index: 1, kind: input, shape index: {}]
  %s2 = inlined_call_operand.hbm [shape: f32[8,128], index: 2, kind: output, shape index: {}]
  %s3 = sld [smem:[#allocation0]]
  $region2: #{tpu_custom_call.1} parent=0
    _
  %s5 = ssub.s32 1, %s3
  %s6 = scalar_select 0, %s5, %s3
  %7 = sst [smem:[#allocation4]] %s0
  %s8 = sld [smem:[#allocation4]]
  %s9 = smul.u32 %s8, 8
  %s10 = smul.addr %s9, 16
  %s11 = scalar_lea.hbm %s1, %s10
  %s13 = sshll.u32 1, 14
  %s14 = sxor.u32 4294967295, %s13
  %s17 = sshll.u32 3, 24
  %s18 = sxor.u32 4294967295, %s17
  %s19 = sand.u32 0, %s18
  %s21 = sor.u32 %s19, 0
  %24 = dma.general %s11, 128, %s2, [#allocation2], [#allocation5], [#allocation6], %s21, 0
  %s25 = smul.u32 8, 1
  %s26 = sshll.u32 %s25, 4
  %27 = dma.done [#allocation2], %s26
  %28 = vsyncmov [#allocation2]
  %s29 = vpop.sfrf %28
  %p30 = scmp.eq.s32.totalorder %s29, 0
  %p31 = pneg %p30
  %33 = shalt.err (%p31)

</llo_original>
